<compile_context>
chip_gen: v7x
topology: tpu7x:2x2x1
jax: 0.10.0
libtpu: 0.0.40
codegen_flags: <defaults>
</compile_context>

<pallas_src>
import jax
import jax.numpy as jnp
from jax.experimental import pallas as pl
from jax.experimental.pallas import tpu as pltpu

# ---- model hyperparameters (small, deterministic) ----
VOCAB_SIZE = 32
EMBED_DIM = 32
NUM_CLASSES = 4
KERNEL_SIZES = (3, 4, 5)
NUM_FILTERS = 16
BATCH = 2
SEQ_LEN = 16                      # power of two (kernel uses & (SEQ_LEN-1))

KMAX = max(KERNEL_SIZES)
N_FEATS = len(KERNEL_SIZES) * NUM_FILTERS     # 48 concat features
N_PAD = 128                                   # lane-dense packed conv-filter dim
C_PAD = 128                                   # lane-dense padded class dim


def textcnn_kernel(tok_ref, w_ref, b_ref, thr_ref, fcw_ref, fcb_ref, out_ref):
    """Fused TextCNN forward.

    tok_ref : [KMAX, B*L, 1] int32  token id at position t+dk (pre-shifted per tap)
    w_ref   : [KMAX, V, N_PAD] f32  embedding-folded, zero-padded, packed conv weights
    b_ref   : [1, N_PAD]       f32  packed conv biases
    thr_ref : [1, N_PAD]       int32 last valid time index per packed filter column
    fcw_ref : [N_PAD, C_PAD]   f32  padded FC weight
    fcb_ref : [1, C_PAD]       f32  padded FC bias
    out_ref : [B, C_PAD]       f32  padded logits (lane-dense store)
    """
    kmax, bl, _ = tok_ref.shape
    vocab = w_ref.shape[1]
    npad = w_ref.shape[2]

    vocab_iota = jax.lax.broadcasted_iota(jnp.int32, (bl, vocab), 1)

    def tap(dk):
        # embedding gather + conv tap dk as ONE MXU matmul:
        #   onehot(token[t+dk]) @ (E @ W[dk])  -> [B*L, N_PAD]
        onehot = (tok_ref[dk] == vocab_iota).astype(jnp.float32)
        return jnp.dot(onehot, w_ref[dk], preferred_element_type=jnp.float32)

    acc = tap(0)                          # init from first tap (no zeros + add)
    for dk in range(1, kmax):             # static unroll over KMAX taps
        acc = acc + tap(dk)

    # Mask conv-output positions that are invalid for each kernel size, then
    # max over time per batch row.  t = flat_row & (L-1)  (L is a power of 2).
    t_idx = jax.lax.broadcasted_iota(jnp.int32, (bl, npad), 0) & (SEQ_LEN - 1)
    masked = jnp.where(t_idx <= thr_ref[...], acc, -1e30)
    pooled = jnp.max(masked.reshape(bl // SEQ_LEN, SEQ_LEN, npad), axis=1)  # [B, N_PAD]

    # Bias + ReLU hoisted after the pool (exact: ReLU monotone, bias time-invariant).
    feats = jnp.maximum(pooled + b_ref[...], 0.0)

    logits = jnp.dot(feats, fcw_ref[...],
                     preferred_element_type=jnp.float32) + fcb_ref[...]
    out_ref[...] = logits.astype(out_ref.dtype)


def init_params(key):
    keys = jax.random.split(key, 9)
    params = {}
    # nn.Embedding(vocab_size, embed_dim)
    params['embedding'] = jax.random.normal(
        keys[0], (VOCAB_SIZE, EMBED_DIM), jnp.float32) * 0.1
    # nn.Conv1d(embed_dim, num_filters, k): stored as [k, E, F] (torch [F, E, k] transposed)
    for i, k in enumerate(KERNEL_SIZES):
        params[f'w{k}'] = jax.random.normal(
            keys[1 + 2 * i], (k, EMBED_DIM, NUM_FILTERS), jnp.float32) * 0.1
        params[f'b{k}'] = jax.random.normal(
            keys[2 + 2 * i], (1, NUM_FILTERS), jnp.float32) * 0.1
    # nn.Linear(3*F, C): stored as [in, out]
    params['fc_w'] = jax.random.normal(
        keys[7], (N_FEATS, NUM_CLASSES), jnp.float32) * 0.1
    params['fc_b'] = jax.random.normal(
        keys[8], (NUM_CLASSES,), jnp.float32) * 0.1
    return params


def prepare_params(params):
    """One-time, input-independent weight packing (pure layout plumbing):
    fold the embedding table into the conv weights (exact, both linear),
    zero-pad every conv to KMAX taps, pack the three filter banks side by side
    padded to 128 lanes, and pad FC weight/bias to lane-dense shapes."""
    F = NUM_FILTERS
    w_fold = jnp.zeros((KMAX, VOCAB_SIZE, N_PAD), jnp.float32)
    b_pack = jnp.zeros((1, N_PAD), jnp.float32)
    for j, k in enumerate(KERNEL_SIZES):
        folded = jnp.einsum('ve,kef->kvf', params['embedding'], params[f'w{k}'])
        w_fold = w_fold.at[:k, :, j * F:(j + 1) * F].set(folded)
        b_pack = b_pack.at[:, j * F:(j + 1) * F].set(params[f'b{k}'])
    # last valid conv-output time index per packed column (pad columns -> treat as k=KMAX)
    col = jnp.arange(N_PAD)
    k_col = jnp.asarray(KERNEL_SIZES, jnp.int32)[
        jnp.minimum(col // F, len(KERNEL_SIZES) - 1)]
    thresh = (SEQ_LEN - k_col).astype(jnp.int32).reshape(1, N_PAD)
    fcw = jnp.zeros((N_PAD, C_PAD), jnp.float32).at[:N_FEATS, :NUM_CLASSES].set(params['fc_w'])
    fcb = jnp.zeros((1, C_PAD), jnp.float32).at[:, :NUM_CLASSES].set(params['fc_b'])
    return w_fold, b_pack, thresh, fcw, fcb


@jax.jit
def textcnn_forward(token_ids, packed):
    w_fold, b_pack, thresh, fcw, fcb = packed
    B, L = token_ids.shape
    bl = B * L
    # Per-tap pre-shifted token indices (tiny int work on B*L ints).  Wrapped /
    # batch-crossing entries only ever feed zero-padded weight columns or
    # masked (invalid) output positions, so no clamping is required.
    tok_flat = token_ids.reshape(bl).astype(jnp.int32)
    tok_shift = jnp.stack([jnp.roll(tok_flat, -dk) for dk in range(KMAX)], axis=0)
    tok_shift = tok_shift.reshape(KMAX, bl, 1)

    out = pl.pallas_call(
        textcnn_kernel,
        out_shape=jax.ShapeDtypeStruct((B, C_PAD), jnp.float32),
        in_specs=[pl.BlockSpec(memory_space=pltpu.MemorySpace.VMEM)] * 6,
        out_specs=pl.BlockSpec(memory_space=pltpu.MemorySpace.VMEM),
    )(tok_shift, w_fold, b_pack, thresh, fcw, fcb)
    return out[:, :NUM_CLASSES]          # drop lane padding of the class dim


def reference_forward(token_ids, params):
    """Pure-JAX mirror of the PyTorch module (unfused) for verification."""
    emb = params['embedding'][token_ids]                      # [B, L, E]
    feats = []
    for k in KERNEL_SIZES:
        w, b = params[f'w{k}'], params[f'b{k}']               # [k,E,F], [1,F]
        lk = SEQ_LEN - k + 1
        conv = jnp.zeros((token_ids.shape[0], lk, NUM_FILTERS), jnp.float32)
        for dk in range(k):
            conv = conv + jnp.einsum('ble,ef->blf', emb[:, dk:dk + lk, :], w[dk])
        conv = jnp.maximum(conv + b[None, :, :], 0.0)         # ReLU(conv + bias)
        feats.append(jnp.max(conv, axis=1))                   # max over time
    feats = jnp.concatenate(feats, axis=-1)                   # [B, 3F]
    return feats @ params['fc_w'] + params['fc_b']


if __name__ == "__main__":
    key = jax.random.PRNGKey(0)
    pkey, xkey = jax.random.split(key)
    params = init_params(pkey)
    packed = prepare_params(params)
    token_ids = jax.random.randint(
        xkey, (BATCH, SEQ_LEN), minval=0, maxval=VOCAB_SIZE, dtype=jnp.int32)

    logits = textcnn_forward(token_ids, packed)
    jax.block_until_ready(logits)

    assert logits.shape == (BATCH, NUM_CLASSES)
    assert logits.dtype == jnp.float32

    ref = reference_forward(token_ids, params)
    err = float(jnp.max(jnp.abs(logits - ref)))
    assert err < 5e-3, f"kernel mismatch vs reference: max abs err {err}"
    print("KERNEL_OK")
</pallas_src>

<mosaic_0001>
module attributes {stable_mosaic.version = 11 : i64} {
  func.func @textcnn_kernel(%arg0: memref<5x32x1xi32, #tpu.memory_space<vmem>>, %arg1: memref<5x32x128xf32, #tpu.memory_space<vmem>>, %arg2: memref<1x128xf32, #tpu.memory_space<vmem>>, %arg3: memref<1x128xi32, #tpu.memory_space<vmem>>, %arg4: memref<128x128xf32, #tpu.memory_space<vmem>>, %arg5: memref<1x128xf32, #tpu.memory_space<vmem>>, %arg6: memref<2x128xf32, #tpu.memory_space<vmem>>) attributes {dimension_semantics = [], scalar_prefetch = 0 : i64, scratch_operands = 0 : i64, tpu.core_type = #tpu.core_type<tc>} {
    %0 = tpu.iota {dimensions = array<i32: 1>} : vector<32x32xi32>
    %c0 = arith.constant 0 : index
    %c0_0 = arith.constant 0 : index
    %c0_1 = arith.constant 0 : index
    %1 = vector.load %arg0[%c0, %c0_0, %c0_1] : memref<5x32x1xi32, #tpu.memory_space<vmem>>, vector<1x32x1xi32>
    %2 = vector.shape_cast %1 : vector<1x32x1xi32> to vector<32x1xi32>
    %3 = vector.broadcast %2 : vector<32x1xi32> to vector<32x32xi32>
    %4 = arith.cmpi eq, %3, %0 : vector<32x32xi32>
    %5 = arith.extui %4 : vector<32x32xi1> to vector<32x32xi32>
    %6 = arith.sitofp %5 : vector<32x32xi32> to vector<32x32xf32>
    %c0_2 = arith.constant 0 : index
    %c0_3 = arith.constant 0 : index
    %c0_4 = arith.constant 0 : index
    %7 = vector.load %arg1[%c0_2, %c0_3, %c0_4] : memref<5x32x128xf32, #tpu.memory_space<vmem>>, vector<1x32x128xf32>
    %8 = vector.shape_cast %7 : vector<1x32x128xf32> to vector<32x128xf32>
    %cst = arith.constant dense<0.000000e+00> : vector<32x128xf32>
    %9 = tpu.matmul %6, %8, %cst {dimension_numbers = #tpu.dot_dimension_numbers<[1], [0], [0], [1], [0, 0, 1, 1], [], []>} : vector<32x32xf32>, vector<32x128xf32>, vector<32x128xf32> -> vector<32x128xf32>
    %c1 = arith.constant 1 : index
    %c0_5 = arith.constant 0 : index
    %c0_6 = arith.constant 0 : index
    %10 = vector.load %arg0[%c1, %c0_5, %c0_6] : memref<5x32x1xi32, #tpu.memory_space<vmem>>, vector<1x32x1xi32>
    %11 = vector.shape_cast %10 : vector<1x32x1xi32> to vector<32x1xi32>
    %12 = vector.broadcast %11 : vector<32x1xi32> to vector<32x32xi32>
    %13 = arith.cmpi eq, %12, %0 : vector<32x32xi32>
    %14 = arith.extui %13 : vector<32x32xi1> to vector<32x32xi32>
    %15 = arith.sitofp %14 : vector<32x32xi32> to vector<32x32xf32>
    %c1_7 = arith.constant 1 : index
    %c0_8 = arith.constant 0 : index
    %c0_9 = arith.constant 0 : index
    %16 = vector.load %arg1[%c1_7, %c0_8, %c0_9] : memref<5x32x128xf32, #tpu.memory_space<vmem>>, vector<1x32x128xf32>
    %17 = vector.shape_cast %16 : vector<1x32x128xf32> to vector<32x128xf32>
    %cst_10 = arith.constant dense<0.000000e+00> : vector<32x128xf32>
    %18 = tpu.matmul %15, %17, %cst_10 {dimension_numbers = #tpu.dot_dimension_numbers<[1], [0], [0], [1], [0, 0, 1, 1], [], []>} : vector<32x32xf32>, vector<32x128xf32>, vector<32x128xf32> -> vector<32x128xf32>
    %19 = arith.addf %9, %18 : vector<32x128xf32>
    %c2 = arith.constant 2 : index
    %c0_11 = arith.constant 0 : index
    %c0_12 = arith.constant 0 : index
    %20 = vector.load %arg0[%c2, %c0_11, %c0_12] : memref<5x32x1xi32, #tpu.memory_space<vmem>>, vector<1x32x1xi32>
    %21 = vector.shape_cast %20 : vector<1x32x1xi32> to vector<32x1xi32>
    %22 = vector.broadcast %21 : vector<32x1xi32> to vector<32x32xi32>
    %23 = arith.cmpi eq, %22, %0 : vector<32x32xi32>
    %24 = arith.extui %23 : vector<32x32xi1> to vector<32x32xi32>
    %25 = arith.sitofp %24 : vector<32x32xi32> to vector<32x32xf32>
    %c2_13 = arith.constant 2 : index
    %c0_14 = arith.constant 0 : index
    %c0_15 = arith.constant 0 : index
    %26 = vector.load %arg1[%c2_13, %c0_14, %c0_15] : memref<5x32x128xf32, #tpu.memory_space<vmem>>, vector<1x32x128xf32>
    %27 = vector.shape_cast %26 : vector<1x32x128xf32> to vector<32x128xf32>
    %cst_16 = arith.constant dense<0.000000e+00> : vector<32x128xf32>
    %28 = tpu.matmul %25, %27, %cst_16 {dimension_numbers = #tpu.dot_dimension_numbers<[1], [0], [0], [1], [0, 0, 1, 1], [], []>} : vector<32x32xf32>, vector<32x128xf32>, vector<32x128xf32> -> vector<32x128xf32>
    %29 = arith.addf %19, %28 : vector<32x128xf32>
    %c3 = arith.constant 3 : index
    %c0_17 = arith.constant 0 : index
    %c0_18 = arith.constant 0 : index
    %30 = vector.load %arg0[%c3, %c0_17, %c0_18] : memref<5x32x1xi32, #tpu.memory_space<vmem>>, vector<1x32x1xi32>
    %31 = vector.shape_cast %30 : vector<1x32x1xi32> to vector<32x1xi32>
    %32 = vector.broadcast %31 : vector<32x1xi32> to vector<32x32xi32>
    %33 = arith.cmpi eq, %32, %0 : vector<32x32xi32>
    %34 = arith.extui %33 : vector<32x32xi1> to vector<32x32xi32>
    %35 = arith.sitofp %34 : vector<32x32xi32> to vector<32x32xf32>
    %c3_19 = arith.constant 3 : index
    %c0_20 = arith.constant 0 : index
    %c0_21 = arith.constant 0 : index
    %36 = vector.load %arg1[%c3_19, %c0_20, %c0_21] : memref<5x32x128xf32, #tpu.memory_space<vmem>>, vector<1x32x128xf32>
    %37 = vector.shape_cast %36 : vector<1x32x128xf32> to vector<32x128xf32>
    %cst_22 = arith.constant dense<0.000000e+00> : vector<32x128xf32>
    %38 = tpu.matmul %35, %37, %cst_22 {dimension_numbers = #tpu.dot_dimension_numbers<[1], [0], [0], [1], [0, 0, 1, 1], [], []>} : vector<32x32xf32>, vector<32x128xf32>, vector<32x128xf32> -> vector<32x128xf32>
    %39 = arith.addf %29, %38 : vector<32x128xf32>
    %c4 = arith.constant 4 : index
    %c0_23 = arith.constant 0 : index
    %c0_24 = arith.constant 0 : index
    %40 = vector.load %arg0[%c4, %c0_23, %c0_24] : memref<5x32x1xi32, #tpu.memory_space<vmem>>, vector<1x32x1xi32>
    %41 = vector.shape_cast %40 : vector<1x32x1xi32> to vector<32x1xi32>
    %42 = vector.broadcast %41 : vector<32x1xi32> to vector<32x32xi32>
    %43 = arith.cmpi eq, %42, %0 : vector<32x32xi32>
    %44 = arith.extui %43 : vector<32x32xi1> to vector<32x32xi32>
    %45 = arith.sitofp %44 : vector<32x32xi32> to vector<32x32xf32>
    %c4_25 = arith.constant 4 : index
    %c0_26 = arith.constant 0 : index
    %c0_27 = arith.constant 0 : index
    %46 = vector.load %arg1[%c4_25, %c0_26, %c0_27] : memref<5x32x128xf32, #tpu.memory_space<vmem>>, vector<1x32x128xf32>
    %47 = vector.shape_cast %46 : vector<1x32x128xf32> to vector<32x128xf32>
    %cst_28 = arith.constant dense<0.000000e+00> : vector<32x128xf32>
    %48 = tpu.matmul %45, %47, %cst_28 {dimension_numbers = #tpu.dot_dimension_numbers<[1], [0], [0], [1], [0, 0, 1, 1], [], []>} : vector<32x32xf32>, vector<32x128xf32>, vector<32x128xf32> -> vector<32x128xf32>
    %49 = arith.addf %39, %48 : vector<32x128xf32>
    %50 = tpu.iota {dimensions = array<i32: 0>} : vector<32x128xi32>
    %c15_i32 = arith.constant 15 : i32
    %51 = vector.broadcast %c15_i32 : i32 to vector<32x128xi32>
    %52 = arith.andi %50, %51 : vector<32x128xi32>
    %c0_29 = arith.constant 0 : index
    %c0_30 = arith.constant 0 : index
    %53 = vector.load %arg3[%c0_29, %c0_30] : memref<1x128xi32, #tpu.memory_space<vmem>>, vector<1x128xi32>
    %54 = vector.broadcast %53 : vector<1x128xi32> to vector<32x128xi32>
    %55 = arith.cmpi sle, %52, %54 : vector<32x128xi32>
    %cst_31 = arith.constant -1.000000e+30 : f32
    %56 = vector.broadcast %cst_31 : f32 to vector<32x128xf32>
    %57 = arith.select %55, %49, %56 : vector<32x128xi1>, vector<32x128xf32>
    %58 = vector.shape_cast %57 : vector<32x128xf32> to vector<2x16x128xf32>
    %cst_32 = arith.constant dense<0xFF800000> : vector<2x128xf32>
    %59 = vector.multi_reduction <maximumf>, %58, %cst_32 [1] : vector<2x16x128xf32> to vector<2x128xf32>
    %c0_33 = arith.constant 0 : index
    %c0_34 = arith.constant 0 : index
    %60 = vector.load %arg2[%c0_33, %c0_34] : memref<1x128xf32, #tpu.memory_space<vmem>>, vector<1x128xf32>
    %61 = vector.broadcast %60 : vector<1x128xf32> to vector<2x128xf32>
    %62 = arith.addf %59, %61 : vector<2x128xf32>
    %cst_35 = arith.constant 0.000000e+00 : f32
    %63 = vector.broadcast %cst_35 : f32 to vector<2x128xf32>
    %64 = arith.maximumf %62, %63 : vector<2x128xf32>
    %c0_36 = arith.constant 0 : index
    %c0_37 = arith.constant 0 : index
    %65 = vector.load %arg4[%c0_36, %c0_37] : memref<128x128xf32, #tpu.memory_space<vmem>>, vector<128x128xf32>
    %cst_38 = arith.constant dense<0.000000e+00> : vector<2x128xf32>
    %66 = tpu.matmul %64, %65, %cst_38 {dimension_numbers = #tpu.dot_dimension_numbers<[1], [0], [0], [1], [0, 0, 1, 1], [], []>} : vector<2x128xf32>, vector<128x128xf32>, vector<2x128xf32> -> vector<2x128xf32>
    %c0_39 = arith.constant 0 : index
    %c0_40 = arith.constant 0 : index
    %67 = vector.load %arg5[%c0_39, %c0_40] : memref<1x128xf32, #tpu.memory_space<vmem>>, vector<1x128xf32>
    %68 = vector.broadcast %67 : vector<1x128xf32> to vector<2x128xf32>
    %69 = arith.addf %66, %68 : vector<2x128xf32>
    %c0_41 = arith.constant 0 : index
    %c0_42 = arith.constant 0 : index
    %70 = vector.load %arg6[%c0_41, %c0_42] : memref<2x128xf32, #tpu.memory_space<vmem>>, vector<2x128xf32>
    tpu.vector_store %arg6[%c0_41, %c0_42], %69 {strides = array<i32>} : memref<2x128xf32, #tpu.memory_space<vmem>>, vector<2x128xf32>,
    return
  }
}

</mosaic_0001>

<llo_original>
// kernel: textcnn_forward.1
$region0: #{textcnn_forward.1}
  #allocation0 [shape = 'u32[]', space=smem, size = 0x4, offset = 0x4, fixed_abs, tag = 'smem constant byte address 0x4 - core index']
  #allocation1 [shape = 'u32[144,128]{1,0:T(1,128)}', space=vmem, size = 0x12000, scoped, tag = 'internal scratch']
  %s0 = inlined_call_operand.vmem [shape: s32[5,32,1], index: 0, kind: input, shape index: {}]
  %s1 = inlined_call_operand.vmem [shape: f32[5,32,128], index: 1, kind: input, shape index: {}]
  %s2 = inlined_call_operand.vmem [shape: f32[1,128], index: 2, kind: input, shape index: {}]
  %s3 = inlined_call_operand.vmem [shape: s32[1,128], index: 3, kind: input, shape index: {}]
  %s4 = inlined_call_operand.hbm [shape: f32[128,128], index: 4, kind: input, shape index: {}]
  %s5 = inlined_call_operand.vmem [shape: f32[1,128], index: 5, kind: input, shape index: {}]
  %s6 = inlined_call_operand.hbm [shape: f32[2,128], index: 6, kind: output, shape index: {}]
  %s7 = sld [smem:[#allocation0]]
  $region38: #{textcnn_forward.1} parent=0
    _
  %s9 = ssub.s32 1, %s7
  %s10 = scalar_select 0, %s9, %s7
  $region1: #{textcnn_forward.1} parent=0
    #allocation2 [shape = 'u8[65536]{0}', space=vmem, size = 0x10000, scoped, tag = 'input window, operand 4, single buffered']
    #allocation3 [shape = 's32[1]{0}', space=sflag, size = 0x4, scoped, tag = 'scoped memory for textcnn_forward.1']
    #allocation4 [shape = 's32[1]{0}', space=sflag, size = 0x4, scoped, tag = 'scoped memory for textcnn_forward.1']
    #allocation5 [shape = 'u8[1024]{0}', space=vmem, size = 0x400, scoped, tag = 'output window, operand 0, single buffered']
    %11 = vsyncpa [#allocation3], 0
    %12 = vsyncpa [#allocation4], 0
    // Predicated region
    $region2: #{textcnn_forward.1} parent=1 // pred_check
      _
    $region3: #{textcnn_forward.1} parent=1 // pred_check_branch
      %14 = sbr.rel (0) target = $region5
    $region4: #{textcnn_forward.1} parent=1 // pred_region
      _
    $region5: #{textcnn_forward.1} parent=1 // pred_fallthru
      _
    // Predicated region
    $region6: #{textcnn_forward.1} parent=1 // pred_check
      _
    $region7: #{textcnn_forward.1} parent=1 // pred_check_branch
      %16 = sbr.rel (0) target = $region9
    $region8: #{textcnn_forward.1} parent=1 // pred_region
      _
    $region9: #{textcnn_forward.1} parent=1 // pred_fallthru
      _
    // Predicated region
    $region10: #{textcnn_forward.1} parent=1 // pred_check
      _
    $region11: #{textcnn_forward.1} parent=1 // pred_check_branch
      %18 = sbr.rel (0) target = $region13
    $region12: #{textcnn_forward.1} parent=1 // pred_region
      _
    $region13: #{textcnn_forward.1} parent=1 // pred_fallthru
      _
    // Predicated region
    $region14: #{textcnn_forward.1} parent=1 // pred_check
      _
    $region15: #{textcnn_forward.1} parent=1 // pred_check_branch
      %20 = sbr.rel (0) target = $region17
    $region16: #{textcnn_forward.1} parent=1 // pred_region
      _
    $region17: #{textcnn_forward.1} parent=1 // pred_fallthru
      _
    // Predicated region
    $region18: #{textcnn_forward.1} parent=1 // pred_check
      _
    $region19: #{textcnn_forward.1} parent=1 // pred_check_branch
      %22 = sbr.rel (0) target = $region21
    $region20: #{textcnn_forward.1} parent=1 // pred_region
      %s24 = ssub.s32 2048, 2048
      %25 = vsyncadd [#allocation3], %s24
      %s26 = sshll.u32 [#allocation2], 4
      %s27 = int_to_ptr.vmem [resolvable:$true] %s26
      %32 = dma.hbm_to_vmem [thread:$0]  %s4, 2048, %s27, [#allocation3], 128, 128, 8
    $region21: #{textcnn_forward.1} parent=1 // pred_fallthru
      _
    // Predicated region
    $region22: #{textcnn_forward.1} parent=1 // pred_check
      _
    $region23: #{textcnn_forward.1} parent=1 // pred_check_branch
      %34 = sbr.rel (0) target = $region25
    $region24: #{textcnn_forward.1} parent=1 // pred_region
      _
    $region25: #{textcnn_forward.1} parent=1 // pred_fallthru
      _
    // Predicated region
    $region26: #{textcnn_forward.1} parent=1 // pred_check
      _
    $region27: #{textcnn_forward.1} parent=1 // pred_check_branch
      %36 = sbr.rel (0) target = $region29
    $region28: #{textcnn_forward.1} parent=1 // pred_region
      %37 = dma.done [#allocation3], 2048
    $region29: #{textcnn_forward.1} parent=1 // pred_fallthru
      _
    %v38 = vlaneseq
    %v39 = vand.u32 %v38, 127
    %v40 = vld [vmem:[%s0] sm:$0xff]
    %v41 = vld [vmem:[%s0 + $0x8] sm:$0xff]
    %v42 = vld [vmem:[%s0 + $0x10] sm:$0xff]
    %v43 = vld [vmem:[%s0 + $0x18] sm:$0xff]
    %44 = vset.pattern.permute.xlu0 0
    %45 = vperm.xlu0 %44, %v40
    %v46 = vpop.permute.xlu0 %45
    %47 = vset.pattern.permute.xlu0 0
    %48 = vperm.xlu0 %47, %v41
    %v49 = vpop.permute.xlu0 %48
    %50 = vset.pattern.permute.xlu0 0
    %51 = vperm.xlu0 %50, %v42
    %v52 = vpop.permute.xlu0 %51
    %53 = vset.pattern.permute.xlu0 0
    %54 = vperm.xlu0 %53, %v43
    %v55 = vpop.permute.xlu0 %54
    %vm56 = vcmp.eq.s32.totalorder %v46, %v39
    %vm57 = vcmp.eq.s32.totalorder %v49, %v39
    %vm58 = vcmp.eq.s32.totalorder %v52, %v39
    %vm59 = vcmp.eq.s32.totalorder %v55, %v39
    %v60 = vsel %vm56, 1, 0
    %v61 = vsel %vm57, 1, 0
    %v62 = vsel %vm58, 1, 0
    %v63 = vsel %vm59, 1, 0
    %v64 = vcvt.s32.f32 %v60
    %v65 = vcvt.s32.f32 %v61
    %v66 = vcvt.s32.f32 %v62
    %v67 = vcvt.s32.f32 %v63
    %v68 = vld [vmem:[%s1] sm:$0xff]
    %v69 = vld [vmem:[%s1 + $0x8] sm:$0xff]
    %v70 = vld [vmem:[%s1 + $0x10] sm:$0xff]
    %v71 = vld [vmem:[%s1 + $0x18] sm:$0xff]
    %s72 = scalar_lea.vmem %s0, 32
    %v73 = vld [vmem:[%s72] sm:$0xff]
    %v74 = vld [vmem:[%s72 + $0x8] sm:$0xff]
    %v75 = vld [vmem:[%s72 + $0x10] sm:$0xff]
    %v76 = vld [vmem:[%s72 + $0x18] sm:$0xff]
    %77 = vset.pattern.permute.xlu0 0
    %78 = vperm.xlu0 %77, %v73
    %v79 = vpop.permute.xlu0 %78
    %80 = vset.pattern.permute.xlu0 0
    %81 = vperm.xlu0 %80, %v74
    %v82 = vpop.permute.xlu0 %81
    %83 = vset.pattern.permute.xlu0 0
    %84 = vperm.xlu0 %83, %v75
    %v85 = vpop.permute.xlu0 %84
    %86 = vset.pattern.permute.xlu0 0
    %87 = vperm.xlu0 %86, %v76
    %v88 = vpop.permute.xlu0 %87
    %vm89 = vcmp.eq.s32.totalorder %v79, %v39
    %vm90 = vcmp.eq.s32.totalorder %v82, %v39
    %vm91 = vcmp.eq.s32.totalorder %v85, %v39
    %vm92 = vcmp.eq.s32.totalorder %v88, %v39
    %v93 = vsel %vm89, 1, 0
    %v94 = vsel %vm90, 1, 0
    %v95 = vsel %vm91, 1, 0
    %v96 = vsel %vm92, 1, 0
    %v97 = vcvt.s32.f32 %v93
    %v98 = vcvt.s32.f32 %v94
    %v99 = vcvt.s32.f32 %v95
    %v100 = vcvt.s32.f32 %v96
    %s101 = scalar_lea.vmem %s1, 32
    %v102 = vld [vmem:[%s101] sm:$0xff]
    %v103 = vld [vmem:[%s101 + $0x8] sm:$0xff]
    %v104 = vld [vmem:[%s101 + $0x10] sm:$0xff]
    %v105 = vld [vmem:[%s101 + $0x18] sm:$0xff]
    %vm106 = vcmask 261120
    %v108 = vsel %vm106, %v97, 0
    %v111 = vsel %vm106, %v98, 0
    %v114 = vsel %vm106, %v99, 0
    %v117 = vsel %vm106, %v100, 0
    %119 = vmatprep.subr.mxu0 0.0
    %120 = vmatpush1.msra.mxu0 %v102
    %121 = vmatprep.subr.mxu0 0.0
    %122 = vmatpush1.msra.mxu0 %v103
    %123 = vmatprep.subr.mxu0 0.0
    %124 = vmatpush1.msra.mxu0 %v104
    %125 = vmatprep.subr.mxu0 0.0
    %126 = vmatpush1.msra.mxu0 %v105
    %127 = vmatprep.subr.mxu0 0.0
    %128 = vmatpush1.msra.mxu0 0.0
    %129 = vmatprep.subr.mxu0 0.0
    %130 = vmatpush1.msra.mxu0 0.0
    %131 = vmatprep.subr.mxu0 0.0
    %132 = vmatpush1.msra.mxu0 0.0
    %133 = vmatprep.subr.mxu0 0.0
    %134 = vmatpush1.msra.mxu0 0.0
    %135 = vmatprep.subr.mxu0 0.0
    %136 = vmatpush1.msra.mxu0 0.0
    %137 = vmatprep.subr.mxu0 0.0
    %138 = vmatpush1.msra.mxu0 0.0
    %139 = vmatprep.subr.mxu0 0.0
    %140 = vmatpush1.msra.mxu0 0.0
    %141 = vmatprep.subr.mxu0 0.0
    %142 = vmatpush1.msra.mxu0 0.0
    %143 = vmatprep.subr.mxu0 0.0
    %144 = vmatpush1.msra.mxu0 0.0
    %145 = vmatprep.subr.mxu0 0.0
    %146 = vmatpush1.msra.mxu0 0.0
    %147 = vmatprep.subr.mxu0 0.0
    %148 = vmatpush1.msra.mxu0 0.0
    %149 = vmatprep.subr.mxu0 0.0
    %150 = vmatpush1.msra.mxu0 0.0
    %151 = vmatprep.subr.mxu0 0.0
    %152 = vmatpush1.msra.mxu0 0.0
    %153 = vmatprep.subr.mxu0 0.0
    %154 = vmatpush1.msra.mxu0 0.0
    %155 = vmatprep.subr.mxu0 0.0
    %156 = vmatpush1.msra.mxu0 0.0
    %157 = vmatprep.subr.mxu0 0.0
    %158 = vmatpush1.msra.mxu0 0.0
    %159 = vmatprep.subr.mxu0 0.0
    %160 = vmatpush1.msra.mxu0 0.0
    %161 = vmatprep.subr.mxu0 0.0
    %162 = vmatpush1.msra.mxu0 0.0
    %163 = vmatprep.subr.mxu0 0.0
    %164 = vmatpush1.msra.mxu0 0.0
    %165 = vmatprep.subr.mxu0 0.0
    %166 = vmatpush1.msra.mxu0 0.0
    %167 = vmatprep.subr.mxu0 0.0
    %168 = vmatpush1.msra.mxu0 0.0
    %169 = vmatprep.subr.mxu0 0.0
    %170 = vmatpush1.msra.mxu0 0.0
    %171 = vmatprep.subr.mxu0 0.0
    %172 = vmatpush1.msra.mxu0 0.0
    %173 = vmatprep.subr.mxu0 0.0
    %174 = vmatpush1.msra.mxu0 0.0
    %175 = vmatprep.subr.mxu0 0.0
    %176 = vmatpush1.msra.mxu0 0.0
    %177 = vmatprep.subr.mxu0 0.0
    %178 = vmatpush1.msra.mxu0 0.0
    %179 = vmatprep.subr.mxu0 0.0
    %180 = vmatpush1.msra.mxu0 0.0
    %181 = vmatprep.subr.mxu0 0.0
    %182 = vmatpush1.msra.mxu0 0.0
    %183 = vmatprep.mubr.f32.mxu0 0.0
    %184 = vmatmul.mubr.f32.gmra.mrb[0].mxu0 %v108
    %v185 = vpop.f32.mrb[0].mxu0
    %v186 = vadd.f32 0.0, %v185
    %v187 = vpop.f32.mrb[0].mxu0
    %188 = vmatprep.mubr.f32.mxu0 0.0
    %189 = vmatmul.mubr.f32.gmra.mrb[0].mxu0 %v111
    %v190 = vpop.f32.mrb[0].mxu0
    %v191 = vadd.f32 0.0, %v190
    %v192 = vpop.f32.mrb[0].mxu0
    %193 = vmatprep.mubr.f32.mxu0 0.0
    %194 = vmatmul.mubr.f32.gmra.mrb[0].mxu0 %v114
    %v195 = vpop.f32.mrb[0].mxu0
    %v196 = vadd.f32 0.0, %v195
    %v197 = vpop.f32.mrb[0].mxu0
    %198 = vmatprep.mubr.f32.mxu0 0.0
    %199 = vmatmul.mubr.f32.gmra.mrb[0].mxu0 %v117
    %v200 = vpop.f32.mrb[0].mxu0
    %v201 = vadd.f32 0.0, %v200
    %v202 = vpop.f32.mrb[0].mxu0
    %203 = vdwg.mxu0
    %v205 = vsel %vm106, %v64, 0
    %v208 = vsel %vm106, %v65, 0
    %v211 = vsel %vm106, %v66, 0
    %v214 = vsel %vm106, %v67, 0
    %216 = vmatprep.subr.mxu0 0.0
    %217 = vmatpush1.msra.mxu0 %v68
    %218 = vmatprep.subr.mxu0 0.0
    %219 = vmatpush1.msra.mxu0 %v69
    %220 = vmatprep.subr.mxu0 0.0
    %221 = vmatpush1.msra.mxu0 %v70
    %222 = vmatprep.subr.mxu0 0.0
    %223 = vmatpush1.msra.mxu0 %v71
    %224 = vmatprep.subr.mxu0 0.0
    %225 = vmatpush1.msra.mxu0 0.0
    %226 = vmatprep.subr.mxu0 0.0
    %227 = vmatpush1.msra.mxu0 0.0
    %228 = vmatprep.subr.mxu0 0.0
    %229 = vmatpush1.msra.mxu0 0.0
    %230 = vmatprep.subr.mxu0 0.0
    %231 = vmatpush1.msra.mxu0 0.0
    %232 = vmatprep.subr.mxu0 0.0
    %233 = vmatpush1.msra.mxu0 0.0
    %234 = vmatprep.subr.mxu0 0.0
    %235 = vmatpush1.msra.mxu0 0.0
    %236 = vmatprep.subr.mxu0 0.0
    %237 = vmatpush1.msra.mxu0 0.0
    %238 = vmatprep.subr.mxu0 0.0
    %239 = vmatpush1.msra.mxu0 0.0
    %240 = vmatprep.subr.mxu0 0.0
    %241 = vmatpush1.msra.mxu0 0.0
    %242 = vmatprep.subr.mxu0 0.0
    %243 = vmatpush1.msra.mxu0 0.0
    %244 = vmatprep.subr.mxu0 0.0
    %245 = vmatpush1.msra.mxu0 0.0
    %246 = vmatprep.subr.mxu0 0.0
    %247 = vmatpush1.msra.mxu0 0.0
    %248 = vmatprep.subr.mxu0 0.0
    %249 = vmatpush1.msra.mxu0 0.0
    %250 = vmatprep.subr.mxu0 0.0
    %251 = vmatpush1.msra.mxu0 0.0
    %252 = vmatprep.subr.mxu0 0.0
    %253 = vmatpush1.msra.mxu0 0.0
    %254 = vmatprep.subr.mxu0 0.0
    %255 = vmatpush1.msra.mxu0 0.0
    %256 = vmatprep.subr.mxu0 0.0
    %257 = vmatpush1.msra.mxu0 0.0
    %258 = vmatprep.subr.mxu0 0.0
    %259 = vmatpush1.msra.mxu0 0.0
    %260 = vmatprep.subr.mxu0 0.0
    %261 = vmatpush1.msra.mxu0 0.0
    %262 = vmatprep.subr.mxu0 0.0
    %263 = vmatpush1.msra.mxu0 0.0
    %264 = vmatprep.subr.mxu0 0.0
    %265 = vmatpush1.msra.mxu0 0.0
    %266 = vmatprep.subr.mxu0 0.0
    %267 = vmatpush1.msra.mxu0 0.0
    %268 = vmatprep.subr.mxu0 0.0
    %269 = vmatpush1.msra.mxu0 0.0
    %270 = vmatprep.subr.mxu0 0.0
    %271 = vmatpush1.msra.mxu0 0.0
    %272 = vmatprep.subr.mxu0 0.0
    %273 = vmatpush1.msra.mxu0 0.0
    %274 = vmatprep.subr.mxu0 0.0
    %275 = vmatpush1.msra.mxu0 0.0
    %276 = vmatprep.subr.mxu0 0.0
    %277 = vmatpush1.msra.mxu0 0.0
    %278 = vmatprep.subr.mxu0 0.0
    %279 = vmatpush1.msra.mxu0 0.0
    %280 = vmatprep.mubr.f32.mxu0 0.0
    %281 = vmatmul.mubr.f32.gmra.mrb[0].mxu0 %v205
    %v282 = vpop.f32.mrb[0].mxu0
    %v283 = vadd.f32 %v186, %v282
    %v284 = vpop.f32.mrb[0].mxu0
    %285 = vmatprep.mubr.f32.mxu0 0.0
    %286 = vmatmul.mubr.f32.gmra.mrb[0].mxu0 %v208
    %v287 = vpop.f32.mrb[0].mxu0
    %v288 = vadd.f32 %v191, %v287
    %v289 = vpop.f32.mrb[0].mxu0
    %290 = vmatprep.mubr.f32.mxu0 0.0
    %291 = vmatmul.mubr.f32.gmra.mrb[0].mxu0 %v211
    %v292 = vpop.f32.mrb[0].mxu0
    %v293 = vadd.f32 %v196, %v292
    %v294 = vpop.f32.mrb[0].mxu0
    %295 = vmatprep.mubr.f32.mxu0 0.0
    %296 = vmatmul.mubr.f32.gmra.mrb[0].mxu0 %v214
    %v297 = vpop.f32.mrb[0].mxu0
    %v298 = vadd.f32 %v201, %v297
    %v299 = vpop.f32.mrb[0].mxu0
    %300 = vdwg.mxu0
    %s301 = scalar_lea.vmem %s0, 64
    %v302 = vld [vmem:[%s301] sm:$0xff]
    %v303 = vld [vmem:[%s301 + $0x8] sm:$0xff]
    %v304 = vld [vmem:[%s301 + $0x10] sm:$0xff]
    %v305 = vld [vmem:[%s301 + $0x18] sm:$0xff]
    %306 = vset.pattern.permute.xlu0 0
    %307 = vperm.xlu0 %306, %v302
    %v308 = vpop.permute.xlu0 %307
    %309 = vset.pattern.permute.xlu0 0
    %310 = vperm.xlu0 %309, %v303
    %v311 = vpop.permute.xlu0 %310
    %312 = vset.pattern.permute.xlu0 0
    %313 = vperm.xlu0 %312, %v304
    %v314 = vpop.permute.xlu0 %313
    %315 = vset.pattern.permute.xlu0 0
    %316 = vperm.xlu0 %315, %v305
    %v317 = vpop.permute.xlu0 %316
    %vm318 = vcmp.eq.s32.totalorder %v308, %v39
    %vm319 = vcmp.eq.s32.totalorder %v311, %v39
    %vm320 = vcmp.eq.s32.totalorder %v314, %v39
    %vm321 = vcmp.eq.s32.totalorder %v317, %v39
    %v322 = vsel %vm318, 1, 0
    %v323 = vsel %vm319, 1, 0
    %v324 = vsel %vm320, 1, 0
    %v325 = vsel %vm321, 1, 0
    %v326 = vcvt.s32.f32 %v322
    %v327 = vcvt.s32.f32 %v323
    %v328 = vcvt.s32.f32 %v324
    %v329 = vcvt.s32.f32 %v325
    %s330 = scalar_lea.vmem %s1, 64
    %v331 = vld [vmem:[%s330] sm:$0xff]
    %v332 = vld [vmem:[%s330 + $0x8] sm:$0xff]
    %v333 = vld [vmem:[%s330 + $0x10] sm:$0xff]
    %v334 = vld [vmem:[%s330 + $0x18] sm:$0xff]
    %v336 = vsel %vm106, %v326, 0
    %v339 = vsel %vm106, %v327, 0
    %v342 = vsel %vm106, %v328, 0
    %v345 = vsel %vm106, %v329, 0
    %347 = vmatprep.subr.mxu0 0.0
    %348 = vmatpush1.msra.mxu0 %v331
    %349 = vmatprep.subr.mxu0 0.0
    %350 = vmatpush1.msra.mxu0 %v332
    %351 = vmatprep.subr.mxu0 0.0
    %352 = vmatpush1.msra.mxu0 %v333
    %353 = vmatprep.subr.mxu0 0.0
    %354 = vmatpush1.msra.mxu0 %v334
    %355 = vmatprep.subr.mxu0 0.0
    %356 = vmatpush1.msra.mxu0 0.0
    %357 = vmatprep.subr.mxu0 0.0
    %358 = vmatpush1.msra.mxu0 0.0
    %359 = vmatprep.subr.mxu0 0.0
    %360 = vmatpush1.msra.mxu0 0.0
    %361 = vmatprep.subr.mxu0 0.0
    %362 = vmatpush1.msra.mxu0 0.0
    %363 = vmatprep.subr.mxu0 0.0
    %364 = vmatpush1.msra.mxu0 0.0
    %365 = vmatprep.subr.mxu0 0.0
    %366 = vmatpush1.msra.mxu0 0.0
    %367 = vmatprep.subr.mxu0 0.0
    %368 = vmatpush1.msra.mxu0 0.0
    %369 = vmatprep.subr.mxu0 0.0
    %370 = vmatpush1.msra.mxu0 0.0
    %371 = vmatprep.subr.mxu0 0.0
    %372 = vmatpush1.msra.mxu0 0.0
    %373 = vmatprep.subr.mxu0 0.0
    %374 = vmatpush1.msra.mxu0 0.0
    %375 = vmatprep.subr.mxu0 0.0
    %376 = vmatpush1.msra.mxu0 0.0
    %377 = vmatprep.subr.mxu0 0.0
    %378 = vmatpush1.msra.mxu0 0.0
    %379 = vmatprep.subr.mxu0 0.0
    %380 = vmatpush1.msra.mxu0 0.0
    %381 = vmatprep.subr.mxu0 0.0
    %382 = vmatpush1.msra.mxu0 0.0
    %383 = vmatprep.subr.mxu0 0.0
    %384 = vmatpush1.msra.mxu0 0.0
    %385 = vmatprep.subr.mxu0 0.0
    %386 = vmatpush1.msra.mxu0 0.0
    %387 = vmatprep.subr.mxu0 0.0
    %388 = vmatpush1.msra.mxu0 0.0
    %389 = vmatprep.subr.mxu0 0.0
    %390 = vmatpush1.msra.mxu0 0.0
    %391 = vmatprep.subr.mxu0 0.0
    %392 = vmatpush1.msra.mxu0 0.0
    %393 = vmatprep.subr.mxu0 0.0
    %394 = vmatpush1.msra.mxu0 0.0
    %395 = vmatprep.subr.mxu0 0.0
    %396 = vmatpush1.msra.mxu0 0.0
    %397 = vmatprep.subr.mxu0 0.0
    %398 = vmatpush1.msra.mxu0 0.0
    %399 = vmatprep.subr.mxu0 0.0
    %400 = vmatpush1.msra.mxu0 0.0
    %401 = vmatprep.subr.mxu0 0.0
    %402 = vmatpush1.msra.mxu0 0.0
    %403 = vmatprep.subr.mxu0 0.0
    %404 = vmatpush1.msra.mxu0 0.0
    %405 = vmatprep.subr.mxu0 0.0
    %406 = vmatpush1.msra.mxu0 0.0
    %407 = vmatprep.subr.mxu0 0.0
    %408 = vmatpush1.msra.mxu0 0.0
    %409 = vmatprep.subr.mxu0 0.0
    %410 = vmatpush1.msra.mxu0 0.0
    %411 = vmatprep.mubr.f32.mxu0 0.0
    %412 = vmatmul.mubr.f32.gmra.mrb[0].mxu0 %v336
    %v413 = vpop.f32.mrb[0].mxu0
    %v414 = vadd.f32 0.0, %v413
    %v415 = vpop.f32.mrb[0].mxu0
    %416 = vmatprep.mubr.f32.mxu0 0.0
    %417 = vmatmul.mubr.f32.gmra.mrb[0].mxu0 %v339
    %v418 = vpop.f32.mrb[0].mxu0
    %v419 = vadd.f32 0.0, %v418
    %v420 = vpop.f32.mrb[0].mxu0
    %421 = vmatprep.mubr.f32.mxu0 0.0
    %422 = vmatmul.mubr.f32.gmra.mrb[0].mxu0 %v342
    %v423 = vpop.f32.mrb[0].mxu0
    %v424 = vadd.f32 0.0, %v423
    %v425 = vpop.f32.mrb[0].mxu0
    %426 = vmatprep.mubr.f32.mxu0 0.0
    %427 = vmatmul.mubr.f32.gmra.mrb[0].mxu0 %v345
    %v428 = vpop.f32.mrb[0].mxu0
    %v429 = vadd.f32 0.0, %v428
    %v430 = vpop.f32.mrb[0].mxu0
    %431 = vdwg.mxu0
    %v432 = vadd.f32 %v283, %v414
    %v433 = vadd.f32 %v288, %v419
    %v434 = vadd.f32 %v293, %v424
    %v435 = vadd.f32 %v298, %v429
    %s436 = scalar_lea.vmem %s0, 96
    %v437 = vld [vmem:[%s436] sm:$0xff]
    %v438 = vld [vmem:[%s436 + $0x8] sm:$0xff]
    %v439 = vld [vmem:[%s436 + $0x10] sm:$0xff]
    %v440 = vld [vmem:[%s436 + $0x18] sm:$0xff]
    %441 = vset.pattern.permute.xlu0 0
    %442 = vperm.xlu0 %441, %v437
    %v443 = vpop.permute.xlu0 %442
    %444 = vset.pattern.permute.xlu0 0
    %445 = vperm.xlu0 %444, %v438
    %v446 = vpop.permute.xlu0 %445
    %447 = vset.pattern.permute.xlu0 0
    %448 = vperm.xlu0 %447, %v439
    %v449 = vpop.permute.xlu0 %448
    %450 = vset.pattern.permute.xlu0 0
    %451 = vperm.xlu0 %450, %v440
    %v452 = vpop.permute.xlu0 %451
    %vm453 = vcmp.eq.s32.totalorder %v443, %v39
    %vm454 = vcmp.eq.s32.totalorder %v446, %v39
    %vm455 = vcmp.eq.s32.totalorder %v449, %v39
    %vm456 = vcmp.eq.s32.totalorder %v452, %v39
    %v457 = vsel %vm453, 1, 0
    %v458 = vsel %vm454, 1, 0
    %v459 = vsel %vm455, 1, 0
    %v460 = vsel %vm456, 1, 0
    %v461 = vcvt.s32.f32 %v457
    %v462 = vcvt.s32.f32 %v458
    %v463 = vcvt.s32.f32 %v459
    %v464 = vcvt.s32.f32 %v460
    %s465 = scalar_lea.vmem %s1, 96
    %v466 = vld [vmem:[%s465] sm:$0xff]
    %v467 = vld [vmem:[%s465 + $0x8] sm:$0xff]
    %v468 = vld [vmem:[%s465 + $0x10] sm:$0xff]
    %v469 = vld [vmem:[%s465 + $0x18] sm:$0xff]
    %v471 = vsel %vm106, %v461, 0
    %v474 = vsel %vm106, %v462, 0
    %v477 = vsel %vm106, %v463, 0
    %v480 = vsel %vm106, %v464, 0
    %482 = vmatprep.subr.mxu0 0.0
    %483 = vmatpush1.msra.mxu0 %v466
    %484 = vmatprep.subr.mxu0 0.0
    %485 = vmatpush1.msra.mxu0 %v467
    %486 = vmatprep.subr.mxu0 0.0
    %487 = vmatpush1.msra.mxu0 %v468
    %488 = vmatprep.subr.mxu0 0.0
    %489 = vmatpush1.msra.mxu0 %v469
    %490 = vmatprep.subr.mxu0 0.0
    %491 = vmatpush1.msra.mxu0 0.0
    %492 = vmatprep.subr.mxu0 0.0
    %493 = vmatpush1.msra.mxu0 0.0
    %494 = vmatprep.subr.mxu0 0.0
    %495 = vmatpush1.msra.mxu0 0.0
    %496 = vmatprep.subr.mxu0 0.0
    %497 = vmatpush1.msra.mxu0 0.0
    %498 = vmatprep.subr.mxu0 0.0
    %499 = vmatpush1.msra.mxu0 0.0
    %500 = vmatprep.subr.mxu0 0.0
    %501 = vmatpush1.msra.mxu0 0.0
    %502 = vmatprep.subr.mxu0 0.0
    %503 = vmatpush1.msra.mxu0 0.0
    %504 = vmatprep.subr.mxu0 0.0
    %505 = vmatpush1.msra.mxu0 0.0
    %506 = vmatprep.subr.mxu0 0.0
    %507 = vmatpush1.msra.mxu0 0.0
    %508 = vmatprep.subr.mxu0 0.0
    %509 = vmatpush1.msra.mxu0 0.0
    %510 = vmatprep.subr.mxu0 0.0
    %511 = vmatpush1.msra.mxu0 0.0
    %512 = vmatprep.subr.mxu0 0.0
    %513 = vmatpush1.msra.mxu0 0.0
    %514 = vmatprep.subr.mxu0 0.0
    %515 = vmatpush1.msra.mxu0 0.0
    %516 = vmatprep.subr.mxu0 0.0
    %517 = vmatpush1.msra.mxu0 0.0
    %518 = vmatprep.subr.mxu0 0.0
    %519 = vmatpush1.msra.mxu0 0.0
    %520 = vmatprep.subr.mxu0 0.0
    %521 = vmatpush1.msra.mxu0 0.0
    %522 = vmatprep.subr.mxu0 0.0
    %523 = vmatpush1.msra.mxu0 0.0
    %524 = vmatprep.subr.mxu0 0.0
    %525 = vmatpush1.msra.mxu0 0.0
    %526 = vmatprep.subr.mxu0 0.0
    %527 = vmatpush1.msra.mxu0 0.0
    %528 = vmatprep.subr.mxu0 0.0
    %529 = vmatpush1.msra.mxu0 0.0
    %530 = vmatprep.subr.mxu0 0.0
    %531 = vmatpush1.msra.mxu0 0.0
    %532 = vmatprep.subr.mxu0 0.0
    %533 = vmatpush1.msra.mxu0 0.0
    %534 = vmatprep.subr.mxu0 0.0
    %535 = vmatpush1.msra.mxu0 0.0
    %536 = vmatprep.subr.mxu0 0.0
    %537 = vmatpush1.msra.mxu0 0.0
    %538 = vmatprep.subr.mxu0 0.0
    %539 = vmatpush1.msra.mxu0 0.0
    %540 = vmatprep.subr.mxu0 0.0
    %541 = vmatpush1.msra.mxu0 0.0
    %542 = vmatprep.subr.mxu0 0.0
    %543 = vmatpush1.msra.mxu0 0.0
    %544 = vmatprep.subr.mxu0 0.0
    %545 = vmatpush1.msra.mxu0 0.0
    %546 = vmatprep.mubr.f32.mxu0 0.0
    %547 = vmatmul.mubr.f32.gmra.mrb[0].mxu0 %v471
    %v548 = vpop.f32.mrb[0].mxu0
    %v549 = vadd.f32 0.0, %v548
    %v550 = vpop.f32.mrb[0].mxu0
    %551 = vmatprep.mubr.f32.mxu0 0.0
    %552 = vmatmul.mubr.f32.gmra.mrb[0].mxu0 %v474
    %v553 = vpop.f32.mrb[0].mxu0
    %v554 = vadd.f32 0.0, %v553
    %v555 = vpop.f32.mrb[0].mxu0
    %556 = vmatprep.mubr.f32.mxu0 0.0
    %557 = vmatmul.mubr.f32.gmra.mrb[0].mxu0 %v477
    %v558 = vpop.f32.mrb[0].mxu0
    %v559 = vadd.f32 0.0, %v558
    %v560 = vpop.f32.mrb[0].mxu0
    %561 = vmatprep.mubr.f32.mxu0 0.0
    %562 = vmatmul.mubr.f32.gmra.mrb[0].mxu0 %v480
    %v563 = vpop.f32.mrb[0].mxu0
    %v564 = vadd.f32 0.0, %v563
    %v565 = vpop.f32.mrb[0].mxu0
    %566 = vdwg.mxu0
    %v567 = vadd.f32 %v432, %v549
    %v568 = vadd.f32 %v433, %v554
    %v569 = vadd.f32 %v434, %v559
    %v570 = vadd.f32 %v435, %v564
    %s571 = scalar_lea.vmem %s0, 128
    %v572 = vld [vmem:[%s571] sm:$0xff]
    %v573 = vld [vmem:[%s571 + $0x8] sm:$0xff]
    %v574 = vld [vmem:[%s571 + $0x10] sm:$0xff]
    %v575 = vld [vmem:[%s571 + $0x18] sm:$0xff]
    %576 = vset.pattern.permute.xlu0 0
    %577 = vperm.xlu0 %576, %v572
    %v578 = vpop.permute.xlu0 %577
    %579 = vset.pattern.permute.xlu0 0
    %580 = vperm.xlu0 %579, %v573
    %v581 = vpop.permute.xlu0 %580
    %582 = vset.pattern.permute.xlu0 0
    %583 = vperm.xlu0 %582, %v574
    %v584 = vpop.permute.xlu0 %583
    %585 = vset.pattern.permute.xlu0 0
    %586 = vperm.xlu0 %585, %v575
    %v587 = vpop.permute.xlu0 %586
    %vm588 = vcmp.eq.s32.totalorder %v578, %v39
    %vm589 = vcmp.eq.s32.totalorder %v581, %v39
    %vm590 = vcmp.eq.s32.totalorder %v584, %v39
    %vm591 = vcmp.eq.s32.totalorder %v587, %v39
    %v592 = vsel %vm588, 1, 0
    %v593 = vsel %vm589, 1, 0
    %v594 = vsel %vm590, 1, 0
    %v595 = vsel %vm591, 1, 0
    %v596 = vcvt.s32.f32 %v592
    %v597 = vcvt.s32.f32 %v593
    %v598 = vcvt.s32.f32 %v594
    %v599 = vcvt.s32.f32 %v595
    %s600 = scalar_lea.vmem %s1, 128
    %v601 = vld [vmem:[%s600] sm:$0xff]
    %v602 = vld [vmem:[%s600 + $0x8] sm:$0xff]
    %v603 = vld [vmem:[%s600 + $0x10] sm:$0xff]
    %v604 = vld [vmem:[%s600 + $0x18] sm:$0xff]
    %v606 = vsel %vm106, %v596, 0
    %v609 = vsel %vm106, %v597, 0
    %v612 = vsel %vm106, %v598, 0
    %v615 = vsel %vm106, %v599, 0
    %617 = vmatprep.subr.mxu0 0.0
    %618 = vmatpush1.msra.mxu0 %v601
    %619 = vmatprep.subr.mxu0 0.0
    %620 = vmatpush1.msra.mxu0 %v602
    %621 = vmatprep.subr.mxu0 0.0
    %622 = vmatpush1.msra.mxu0 %v603
    %623 = vmatprep.subr.mxu0 0.0
    %624 = vmatpush1.msra.mxu0 %v604
    %625 = vmatprep.subr.mxu0 0.0
    %626 = vmatpush1.msra.mxu0 0.0
    %627 = vmatprep.subr.mxu0 0.0
    %628 = vmatpush1.msra.mxu0 0.0
    %629 = vmatprep.subr.mxu0 0.0
    %630 = vmatpush1.msra.mxu0 0.0
    %631 = vmatprep.subr.mxu0 0.0
    %632 = vmatpush1.msra.mxu0 0.0
    %633 = vmatprep.subr.mxu0 0.0
    %634 = vmatpush1.msra.mxu0 0.0
    %635 = vmatprep.subr.mxu0 0.0
    %636 = vmatpush1.msra.mxu0 0.0
    %637 = vmatprep.subr.mxu0 0.0
    %638 = vmatpush1.msra.mxu0 0.0
    %639 = vmatprep.subr.mxu0 0.0
    %640 = vmatpush1.msra.mxu0 0.0
    %641 = vmatprep.subr.mxu0 0.0
    %642 = vmatpush1.msra.mxu0 0.0
    %643 = vmatprep.subr.mxu0 0.0
    %644 = vmatpush1.msra.mxu0 0.0
    %645 = vmatprep.subr.mxu0 0.0
    %646 = vmatpush1.msra.mxu0 0.0
    %647 = vmatprep.subr.mxu0 0.0
    %648 = vmatpush1.msra.mxu0 0.0
    %649 = vmatprep.subr.mxu0 0.0
    %650 = vmatpush1.msra.mxu0 0.0
    %651 = vmatprep.subr.mxu0 0.0
    %652 = vmatpush1.msra.mxu0 0.0
    %653 = vmatprep.subr.mxu0 0.0
    %654 = vmatpush1.msra.mxu0 0.0
    %655 = vmatprep.subr.mxu0 0.0
    %656 = vmatpush1.msra.mxu0 0.0
    %657 = vmatprep.subr.mxu0 0.0
    %658 = vmatpush1.msra.mxu0 0.0
    %659 = vmatprep.subr.mxu0 0.0
    %660 = vmatpush1.msra.mxu0 0.0
    %661 = vmatprep.subr.mxu0 0.0
    %662 = vmatpush1.msra.mxu0 0.0
    %663 = vmatprep.subr.mxu0 0.0
    %664 = vmatpush1.msra.mxu0 0.0
    %665 = vmatprep.subr.mxu0 0.0
    %666 = vmatpush1.msra.mxu0 0.0
    %667 = vmatprep.subr.mxu0 0.0
    %668 = vmatpush1.msra.mxu0 0.0
    %669 = vmatprep.subr.mxu0 0.0
    %670 = vmatpush1.msra.mxu0 0.0
    %671 = vmatprep.subr.mxu0 0.0
    %672 = vmatpush1.msra.mxu0 0.0
    %673 = vmatprep.subr.mxu0 0.0
    %674 = vmatpush1.msra.mxu0 0.0
    %675 = vmatprep.subr.mxu0 0.0
    %676 = vmatpush1.msra.mxu0 0.0
    %677 = vmatprep.subr.mxu0 0.0
    %678 = vmatpush1.msra.mxu0 0.0
    %679 = vmatprep.subr.mxu0 0.0
    %680 = vmatpush1.msra.mxu0 0.0
    %681 = vmatprep.mubr.f32.mxu0 0.0
    %682 = vmatmul.mubr.f32.gmra.mrb[0].mxu0 %v606
    %v683 = vpop.f32.mrb[0].mxu0
    %v684 = vadd.f32 0.0, %v683
    %v685 = vpop.f32.mrb[0].mxu0
    %686 = vmatprep.mubr.f32.mxu0 0.0
    %687 = vmatmul.mubr.f32.gmra.mrb[0].mxu0 %v609
    %v688 = vpop.f32.mrb[0].mxu0
    %v689 = vadd.f32 0.0, %v688
    %v690 = vpop.f32.mrb[0].mxu0
    %691 = vmatprep.mubr.f32.mxu0 0.0
    %692 = vmatmul.mubr.f32.gmra.mrb[0].mxu0 %v612
    %v693 = vpop.f32.mrb[0].mxu0
    %v694 = vadd.f32 0.0, %v693
    %v695 = vpop.f32.mrb[0].mxu0
    %696 = vmatprep.mubr.f32.mxu0 0.0
    %697 = vmatmul.mubr.f32.gmra.mrb[0].mxu0 %v615
    %v698 = vpop.f32.mrb[0].mxu0
    %v699 = vadd.f32 0.0, %v698
    %v700 = vpop.f32.mrb[0].mxu0
    %701 = vdwg.mxu0
    %v702 = vadd.f32 %v567, %v684
    %v703 = vadd.f32 %v568, %v689
    %v704 = vadd.f32 %v569, %v694
    %v705 = vadd.f32 %v570, %v699
    %v706 = vlaneseq
    %v707 = vshrl.u32 %v706, 7
    %v708 = vadd.s32 %v707, 8
    %v709 = vadd.s32 %v707, 16
    %v710 = vadd.s32 %v707, 24
    %v711 = vand.u32 %v707, 15
    %v712 = vand.u32 %v708, 15
    %v713 = vand.u32 %v709, 15
    %v714 = vand.u32 %v710, 15
    %v715 = vld [vmem:[%s3] sm:$0x1]
    %v716 = vlaneseq
    %v717 = vshrl.u32 %v716, 7
    %v718 = vsub.s32 0, %v717
    %v719 = vrot.slane %v715, %v718
    %vm720 = vcmp.le.s32.totalorder %v711, %v719
    %vm721 = vcmp.le.s32.totalorder %v712, %v719
    %vm722 = vcmp.le.s32.totalorder %v713, %v719
    %vm723 = vcmp.le.s32.totalorder %v714, %v719
    %v724 = vsel %vm720, %v702, -1e+30
    %v725 = vsel %vm721, %v703, -1e+30
    %v726 = vsel %vm722, %v704, -1e+30
    %v727 = vsel %vm723, %v705, -1e+30
    %v728 = vmax.f32 %v724, %v725
    %v729 = vrot.slane %v728, 4
    %v730 = vmax.f32 %v728, %v729
    %v731 = vrot.slane %v730, 2
    %v732 = vmax.f32 %v730, %v731
    %v733 = vrot.slane %v732, 1
    %v734 = vmax.f32 %v732, %v733
    %v735 = vmax.f32 %v726, %v727
    %v736 = vrot.slane %v735, 4
    %v737 = vmax.f32 %v735, %v736
    %v738 = vrot.slane %v737, 2
    %v739 = vmax.f32 %v737, %v738
    %v740 = vrot.slane %v739, 1
    %v741 = vmax.f32 %v739, %v740
    %v742 = vld [vmem:[%s2] sm:$0x1]
    %v744 = vlaneseq
    %v745 = vshrl.u32 %v744, 7
    %v746 = vsub.s32 0, %v745
    %v747 = vrot.slane %v742, %v746
    %v749 = vadd.f32 %v734, %v747
    %v750 = vadd.f32 %v741, %v747
    %v751 = vmax.f32 %v749, 0.0
    %v752 = vmax.f32 %v750, 0.0
    %v753 = vld [vmem:[#allocation2] sm:$0xff]
    %v754 = vld [vmem:[#allocation2 + $0x8] sm:$0xff]
    %v755 = vld [vmem:[#allocation2 + $0x10] sm:$0xff]
    %v756 = vld [vmem:[#allocation2 + $0x18] sm:$0xff]
    %v757 = vld [vmem:[#allocation2 + $0x20] sm:$0xff]
    %v758 = vld [vmem:[#allocation2 + $0x28] sm:$0xff]
    %v759 = vld [vmem:[#allocation2 + $0x30] sm:$0xff]
    %v760 = vld [vmem:[#allocation2 + $0x38] sm:$0xff]
    %v761 = vld [vmem:[#allocation2 + $0x40] sm:$0xff]
    %v762 = vld [vmem:[#allocation2 + $0x48] sm:$0xff]
    %v763 = vld [vmem:[#allocation2 + $0x50] sm:$0xff]
    %v764 = vld [vmem:[#allocation2 + $0x58] sm:$0xff]
    %v765 = vld [vmem:[#allocation2 + $0x60] sm:$0xff]
    %v766 = vld [vmem:[#allocation2 + $0x68] sm:$0xff]
    %v767 = vld [vmem:[#allocation2 + $0x70] sm:$0xff]
    %v768 = vld [vmem:[#allocation2 + $0x78] sm:$0xff]
    %v769 = vld [vmem:[%s5] sm:$0x1]
    %v771 = vlaneseq
    %v772 = vshrl.u32 %v771, 7
    %v773 = vsub.s32 0, %v772
    %v774 = vrot.slane %v769, %v773
    %v778 = vrot.slane %v752, 7
    %vm779 = vcmask 1041409
    %v780 = vsel %vm779, %v778, %v751
    %782 = vmatprep.subr.mxu0 0.0
    %783 = vmatpush1.msra.mxu0 %v753
    %784 = vmatprep.subr.mxu0 0.0
    %785 = vmatpush1.msra.mxu0 %v754
    %786 = vmatprep.subr.mxu0 0.0
    %787 = vmatpush1.msra.mxu0 %v755
    %788 = vmatprep.subr.mxu0 0.0
    %789 = vmatpush1.msra.mxu0 %v756
    %790 = vmatprep.subr.mxu0 0.0
    %791 = vmatpush1.msra.mxu0 %v757
    %792 = vmatprep.subr.mxu0 0.0
    %793 = vmatpush1.msra.mxu0 %v758
    %794 = vmatprep.subr.mxu0 0.0
    %795 = vmatpush1.msra.mxu0 %v759
    %796 = vmatprep.subr.mxu0 0.0
    %797 = vmatpush1.msra.mxu0 %v760
    %798 = vmatprep.subr.mxu0 0.0
    %799 = vmatpush1.msra.mxu0 %v761
    %800 = vmatprep.subr.mxu0 0.0
    %801 = vmatpush1.msra.mxu0 %v762
    %802 = vmatprep.subr.mxu0 0.0
    %803 = vmatpush1.msra.mxu0 %v763
    %804 = vmatprep.subr.mxu0 0.0
    %805 = vmatpush1.msra.mxu0 %v764
    %806 = vmatprep.subr.mxu0 0.0
    %807 = vmatpush1.msra.mxu0 %v765
    %808 = vmatprep.subr.mxu0 0.0
    %809 = vmatpush1.msra.mxu0 %v766
    %810 = vmatprep.subr.mxu0 0.0
    %811 = vmatpush1.msra.mxu0 %v767
    %812 = vmatprep.subr.mxu0 0.0
    %813 = vmatpush1.msra.mxu0 %v768
    %814 = vmatprep.subr.mxu0 0.0
    %815 = vmatpush1.msra.mxu0 0.0
    %816 = vmatprep.subr.mxu0 0.0
    %817 = vmatpush1.msra.mxu0 0.0
    %818 = vmatprep.subr.mxu0 0.0
    %819 = vmatpush1.msra.mxu0 0.0
    %820 = vmatprep.subr.mxu0 0.0
    %821 = vmatpush1.msra.mxu0 0.0
    %822 = vmatprep.subr.mxu0 0.0
    %823 = vmatpush1.msra.mxu0 0.0
    %824 = vmatprep.subr.mxu0 0.0
    %825 = vmatpush1.msra.mxu0 0.0
    %826 = vmatprep.subr.mxu0 0.0
    %827 = vmatpush1.msra.mxu0 0.0
    %828 = vmatprep.subr.mxu0 0.0
    %829 = vmatpush1.msra.mxu0 0.0
    %830 = vmatprep.subr.mxu0 0.0
    %831 = vmatpush1.msra.mxu0 0.0
    %832 = vmatprep.subr.mxu0 0.0
    %833 = vmatpush1.msra.mxu0 0.0
    %834 = vmatprep.subr.mxu0 0.0
    %835 = vmatpush1.msra.mxu0 0.0
    %836 = vmatprep.subr.mxu0 0.0
    %837 = vmatpush1.msra.mxu0 0.0
    %838 = vmatprep.subr.mxu0 0.0
    %839 = vmatpush1.msra.mxu0 0.0
    %840 = vmatprep.subr.mxu0 0.0
    %841 = vmatpush1.msra.mxu0 0.0
    %842 = vmatprep.subr.mxu0 0.0
    %843 = vmatpush1.msra.mxu0 0.0
    %844 = vmatprep.subr.mxu0 0.0
    %845 = vmatpush1.msra.mxu0 0.0
    %846 = vmatprep.mubr.f32.mxu0 0.0
    %847 = vmatmul.mubr.f32.gmra.mrb[0].mxu0 %v780
    %v848 = vpop.f32.mrb[0].mxu0
    %v849 = vadd.f32 %v774, %v848
    %v850 = vpop.f32.mrb[0].mxu0
    %851 = vdwg.mxu0
    %852 = vst [vmem:[#allocation5] sm:$0x3] %v849
    // Predicated region
    $region30: #{textcnn_forward.1} parent=1 // pred_check
      _
    $region31: #{textcnn_forward.1} parent=1 // pred_check_branch
      %854 = sbr.rel (0) target = $region33
    $region32: #{textcnn_forward.1} parent=1 // pred_region
      %s856 = ssub.s32 32, 32
      %857 = vsyncadd [#allocation4], %s856
      %s859 = sshll.u32 [#allocation5], 4
      %s860 = int_to_ptr.vmem [resolvable:$true] %s859
      %862 = dma.vmem_to_hbm [thread:$0]  %s860, 32, %s6, [#allocation4]
    $region33: #{textcnn_forward.1} parent=1 // pred_fallthru
      _
    // Predicated region
    $region34: #{textcnn_forward.1} parent=1 // pred_check
      _
    $region35: #{textcnn_forward.1} parent=1 // pred_check_branch
      %864 = sbr.rel (0) target = $region37
    $region36: #{textcnn_forward.1} parent=1 // pred_region
      %865 = dma.done [#allocation4], 32
    $region37: #{textcnn_forward.1} parent=1 // pred_fallthru
      _
    %866 = vsyncpa [#allocation3], 1
    %867 = vsyncpa [#allocation4], 1

</llo_original>
